<compile_context>
chip_gen: v5e
topology: v5e:2x2
jax: 0.10.0
libtpu: 0.0.40
codegen_flags: <defaults>
</compile_context>

<pallas_src>
import functools
import numpy as np

import jax
import jax.numpy as jnp
from jax.experimental import pallas as pl
from jax.experimental.pallas import tpu as pltpu

LANES = 128


def _round_up(x, m):
    return -(-x // m) * m


def _sum_kernel(*refs, n, weighted):
    """Weighted/plain sum of n equally-shaped (block_rows, 128) tiles.

    refs layout:
      weighted:   (w_smem, x0, x1, ..., x_{n-1}, out)
      unweighted: (x0, x1, ..., x_{n-1}, out)
    """
    if weighted:
        w_ref = refs[0]
        x_refs = refs[1:1 + n]
        o_ref = refs[1 + n]
    else:
        w_ref = None
        x_refs = refs[:n]
        o_ref = refs[n]

    # Accumulate in f32 for floating dtypes (bf16/f16 inputs, f32 weights),
    # cast exactly once at the store.
    if jnp.issubdtype(o_ref.dtype, jnp.floating):
        acc_dtype = jnp.float32
    else:
        acc_dtype = o_ref.dtype

    acc = x_refs[0][...].astype(acc_dtype)
    for i in range(1, n):
        xi = x_refs[i][...].astype(acc_dtype)
        if weighted:
            acc = acc + xi * w_ref[i - 1]     # scalar (SMEM) * vreg broadcast
        else:
            acc = acc + xi
    o_ref[...] = acc.astype(o_ref.dtype)      # single lane-dense full-slab store


def sum_forward(xs, w=None, *,
                vmem_budget_bytes=40 * 1024 * 1024,
                max_block_rows=4096):
    """Pallas forward for the `Sum` module.

    xs: list of n arrays, all the same shape/dtype.
    w:  optional (n-1,) parameter (as in the PyTorch module, weight=True).
    """
    n = len(xs)
    assert n >= 2
    weighted = w is not None
    shape = xs[0].shape
    dtype = xs[0].dtype
    total = int(np.prod(shape))
    itemsize = np.dtype(dtype).itemsize

    # lane-dense 2-D layout: (rows, 128); pad ONLY to the next multiple of 128
    # (common NCHW sizes need no padding at all).
    rows = _round_up(total, LANES) // LANES
    padded = rows * LANES

    def prep(x):
        xf = x.reshape(-1)
        if padded != total:
            xf = jnp.pad(xf, (0, padded - total))
        return xf.reshape(rows, LANES)

    inputs = [prep(x) for x in xs]

    # Sublane packing: 8 rows for 32-bit, 16 for 16-bit, 32 for 8-bit dtypes.
    row_align = max(8, (8 * 4) // itemsize)

    if rows <= row_align:
        # Tiny input: one full-extent block (block shape == array shape).
        block_rows = rows
    else:
        # VMEM budget for (n inputs + 1 output) double-buffered tiles.
        budget_rows = vmem_budget_bytes // ((n + 1) * 2 * LANES * itemsize)
        budget_rows = max(row_align, (budget_rows // row_align) * row_align)
        # Guarantee >= 2 grid steps so "parallel" shards across both TCs (v7x).
        half_rows = _round_up(pl.cdiv(rows, 2), row_align)
        block_rows = min(max_block_rows, budget_rows, half_rows)
        block_rows = max(block_rows, row_align)
        block_rows = min(block_rows, rows)

    grid = (pl.cdiv(rows, block_rows),)

    x_spec = pl.BlockSpec((block_rows, LANES), lambda i: (i, 0))
    in_specs = [x_spec] * n

    if weighted:
        # tiny (n-1,) parameter transform; data tensors are NOT pre-scaled.
        eff_w = (2.0 * jax.nn.sigmoid(w)).astype(jnp.float32)
        in_specs = [pl.BlockSpec(memory_space=pltpu.MemorySpace.SMEM)] + in_specs
        inputs = [eff_w] + inputs

    # VMEM limit derived from the actual footprint (with headroom), 32 MiB floor.
    footprint = (n + 1) * 2 * block_rows * LANES * itemsize
    vmem_limit = min(max(footprint + (4 << 20), 32 << 20), 48 << 20)

    flops_per_elem = (2 * (n - 1)) if weighted else (n - 1)
    cost = pl.CostEstimate(
        flops=flops_per_elem * total,
        transcendentals=0,
        bytes_accessed=(n + 1) * total * itemsize,
    )

    kernel = functools.partial(_sum_kernel, n=n, weighted=weighted)

    out = pl.pallas_call(
        kernel,
        out_shape=jax.ShapeDtypeStruct((rows, LANES), dtype),
        grid=grid,
        in_specs=in_specs,
        out_specs=x_spec,
        compiler_params=pltpu.CompilerParams(
            dimension_semantics=("parallel",),
            vmem_limit_bytes=vmem_limit,
        ),
        cost_estimate=cost,
    )(*inputs)

    if padded == total:
        return out.reshape(shape)
    return out.reshape(-1)[:total].reshape(shape)


def sum_reference(xs, w=None):
    """Pure-JAX reference matching the PyTorch module (verification only)."""
    y = xs[0]
    if w is not None:
        ew = 2.0 * jax.nn.sigmoid(w.astype(jnp.float32))
        for i in range(1, len(xs)):
            y = y + xs[i] * ew[i - 1].astype(y.dtype) if False else y + (xs[i].astype(jnp.float32) * ew[i - 1]).astype(y.dtype)
    else:
        for i in range(1, len(xs)):
            y = y + xs[i]
    return y


def sum_reference_exact(xs, w=None):
    """Straightforward reference (f32 math for floating inputs)."""
    acc_dtype = jnp.float32 if jnp.issubdtype(xs[0].dtype, jnp.floating) else xs[0].dtype
    y = xs[0].astype(acc_dtype)
    if w is not None:
        ew = 2.0 * jax.nn.sigmoid(w.astype(jnp.float32))
        for i in range(1, len(xs)):
            y = y + xs[i].astype(acc_dtype) * ew[i - 1]
    else:
        for i in range(1, len(xs)):
            y = y + xs[i].astype(acc_dtype)
    return y.astype(xs[0].dtype)


if __name__ == "__main__":
    key = jax.random.PRNGKey(0)

    # --- Case 1: Sum(n=3, weight=True) on three (2, 4, 16, 16) f32 maps ----
    n = 3
    N, C, H, W = 2, 4, 16, 16
    keys = jax.random.split(key, n)
    xs = [jax.random.normal(k, (N, C, H, W), dtype=jnp.float32) for k in keys]
    # PyTorch init: w = -arange(1, n) / 2
    w = -jnp.arange(1.0, float(n), dtype=jnp.float32) / 2.0

    out_w = jax.block_until_ready(sum_forward(xs, w))
    ref_w = sum_reference_exact(xs, w)
    np.testing.assert_allclose(np.asarray(out_w), np.asarray(ref_w),
                               atol=1e-5, rtol=1e-5)

    # --- Case 2: unweighted path (weight=False) ----------------------------
    out_u = jax.block_until_ready(sum_forward(xs, None))
    ref_u = sum_reference_exact(xs, None)
    np.testing.assert_allclose(np.asarray(out_u), np.asarray(ref_u),
                               atol=1e-5, rtol=1e-5)

    # --- Case 3: bf16 inputs, weighted (exercises the f32-acc + cast path) -
    xs_bf = [x.astype(jnp.bfloat16) for x in xs]
    out_bf = jax.block_until_ready(sum_forward(xs_bf, w))
    ref_bf = sum_reference_exact(xs_bf, w)
    np.testing.assert_allclose(np.asarray(out_bf, dtype=np.float32),
                               np.asarray(ref_bf, dtype=np.float32),
                               atol=3e-2, rtol=3e-2)

    # --- Case 4: total not a multiple of 128 (exercises the pad/slice path)
    keys2 = jax.random.split(jax.random.PRNGKey(1), 2)
    xs_odd = [jax.random.normal(k, (2, 3, 5, 7), dtype=jnp.float32) for k in keys2]
    w2 = -jnp.arange(1.0, 2.0, dtype=jnp.float32) / 2.0
    out_o = jax.block_until_ready(sum_forward(xs_odd, w2))
    ref_o = sum_reference_exact(xs_odd, w2)
    np.testing.assert_allclose(np.asarray(out_o), np.asarray(ref_o),
                               atol=1e-5, rtol=1e-5)

    print("KERNEL_OK")
</pallas_src>

<mosaic_0001>
module attributes {stable_mosaic.version = 11 : i64} {
  func.func @_sum_kernel(%arg0: i32, %arg1: memref<2xf32, #tpu.memory_space<smem>>, %arg2: memref<8x128xf32, #tpu.memory_space<vmem>>, %arg3: memref<8x128xf32, #tpu.memory_space<vmem>>, %arg4: memref<8x128xf32, #tpu.memory_space<vmem>>, %arg5: memref<8x128xf32, #tpu.memory_space<vmem>>) attributes {dimension_semantics = [#tpu.dimension_semantics<parallel>], iteration_bounds = array<i64: 2>, scalar_prefetch = 0 : i64, scratch_operands = 0 : i64, tpu.core_type = #tpu.core_type<tc>, window_params = [{transform_indices = @transform_0, window_bounds = array<i64: 2>}, {transform_indices = @transform_1, window_bounds = array<i64: 8, 128>}, {transform_indices = @transform_2, window_bounds = array<i64: 8, 128>}, {transform_indices = @transform_3, window_bounds = array<i64: 8, 128>}, {transform_indices = @transform_4, window_bounds = array<i64: 8, 128>}]} {
    %c0 = arith.constant 0 : index
    %c0_0 = arith.constant 0 : index
    %0 = vector.load %arg2[%c0, %c0_0] : memref<8x128xf32, #tpu.memory_space<vmem>>, vector<8x128xf32>
    %c0_1 = arith.constant 0 : index
    %c0_2 = arith.constant 0 : index
    %1 = vector.load %arg3[%c0_1, %c0_2] : memref<8x128xf32, #tpu.memory_space<vmem>>, vector<8x128xf32>
    %c0_3 = arith.constant 0 : index
    %2 = memref.load %arg1[%c0_3] : memref<2xf32, #tpu.memory_space<smem>>
    %3 = vector.broadcast %2 : f32 to vector<8x128xf32>
    %4 = arith.mulf %1, %3 : vector<8x128xf32>
    %5 = arith.addf %0, %4 : vector<8x128xf32>
    %c0_4 = arith.constant 0 : index
    %c0_5 = arith.constant 0 : index
    %6 = vector.load %arg4[%c0_4, %c0_5] : memref<8x128xf32, #tpu.memory_space<vmem>>, vector<8x128xf32>
    %c1 = arith.constant 1 : index
    %7 = memref.load %arg1[%c1] : memref<2xf32, #tpu.memory_space<smem>>
    %8 = vector.broadcast %7 : f32 to vector<8x128xf32>
    %9 = arith.mulf %6, %8 : vector<8x128xf32>
    %10 = arith.addf %5, %9 : vector<8x128xf32>
    %c0_6 = arith.constant 0 : index
    %c0_7 = arith.constant 0 : index
    %11 = vector.load %arg5[%c0_6, %c0_7] : memref<8x128xf32, #tpu.memory_space<vmem>>, vector<8x128xf32>
    tpu.vector_store %arg5[%c0_6, %c0_7], %10 {strides = array<i32>} : memref<8x128xf32, #tpu.memory_space<vmem>>, vector<8x128xf32>,
    return
  }
  func.func @transform_0(%arg0: i32) -> i32 {
    %c0_i32 = arith.constant 0 : i32
    %c0_i32_0 = arith.constant 0 : i32
    return %c0_i32 : i32
  }
  func.func @transform_1(%arg0: i32) -> (i32, i32) {
    %c0_i32 = arith.constant 0 : i32
    %c0_i32_0 = arith.constant 0 : i32
    return %arg0, %c0_i32 : i32, i32
  }
  func.func @transform_2(%arg0: i32) -> (i32, i32) {
    %c0_i32 = arith.constant 0 : i32
    %c0_i32_0 = arith.constant 0 : i32
    return %arg0, %c0_i32 : i32, i32
  }
  func.func @transform_3(%arg0: i32) -> (i32, i32) {
    %c0_i32 = arith.constant 0 : i32
    %c0_i32_0 = arith.constant 0 : i32
    return %arg0, %c0_i32 : i32, i32
  }
  func.func @transform_4(%arg0: i32) -> (i32, i32) {
    %c0_i32 = arith.constant 0 : i32
    %c0_i32_0 = arith.constant 0 : i32
    return %arg0, %c0_i32 : i32, i32
  }
}

</mosaic_0001>

<llo_original>
// kernel: tpu_custom_call.1
$region0: #{tpu_custom_call.1}
  #allocation0 [shape = 'u32[]', space=smem, size = 0x4, offset = 0x4, fixed_abs, tag = 'smem constant byte address 0x4 - core index']
  #allocation1 [shape = 'u32[72,128]{1,0:T(1,128)}', space=vmem, size = 0x9000, scoped, tag = 'internal scratch']
  %s0 = inlined_call_operand.hbm [shape: f32[2], index: 0, kind: input, shape index: {}]
  %s1 = inlined_call_operand.hbm [shape: f32[16,128], index: 1, kind: input, shape index: {}]
  %s2 = inlined_call_operand.hbm [shape: f32[16,128], index: 2, kind: input, shape index: {}]
  %s3 = inlined_call_operand.hbm [shape: f32[16,128], index: 3, kind: input, shape index: {}]
  %s4 = inlined_call_operand.hbm [shape: f32[16,128], index: 4, kind: output, shape index: {}]
  %s5 = sld [smem:[#allocation0]]
  $region65: #{tpu_custom_call.1} parent=0
    _
  %s7 = ssub.s32 1, %s5
  %s8 = scalar_select 0, %s7, %s5
  $region1: #{tpu_custom_call.1} parent=0
    #allocation2 [shape = 'u8[512]{0}', space=smem, size = 0x200, scoped, tag = 'input window, operand 0, single buffered']
    #allocation3 [shape = 's32[2]{0}', space=sflag, size = 0x8, scoped, tag = 'scoped memory for tpu_custom_call.1']
    #allocation4 [shape = 's32[2]{0}', space=sflag, size = 0x8, scoped, tag = 'scoped memory for tpu_custom_call.1']
    #allocation5 [shape = 's32[2]{0}', space=sflag, size = 0x8, scoped, tag = 'scoped memory for tpu_custom_call.1']
    #allocation6 [shape = 'u8[8192]{0}', space=vmem, size = 0x2000, scoped, tag = 'input window, operand 1']
    #allocation7 [shape = 'u8[8192]{0}', space=vmem, size = 0x2000, scoped, tag = 'input window, operand 2']
    #allocation8 [shape = 's32[2]{0}', space=sflag, size = 0x8, scoped, tag = 'scoped memory for tpu_custom_call.1']
    #allocation9 [shape = 'u8[8192]{0}', space=vmem, size = 0x2000, scoped, tag = 'input window, operand 3']
    #allocation10 [shape = 'u8[8192]{0}', space=vmem, size = 0x2000, scoped, tag = 'output window, operand 0']
    %9 = vsyncpa [#allocation5], 0
    %10 = vsyncpa [#allocation3], 0
    %s11 = scalar_lea.sflag [#allocation3], 1
    %12 = vsyncpa %s11, 0
    %13 = vsyncpa [#allocation8], 0
    %s14 = scalar_lea.sflag [#allocation8], 1
    %15 = vsyncpa %s14, 0
    %16 = vsyncpa [#allocation4], 0
    %s17 = scalar_lea.sflag [#allocation4], 1
    %18 = vsyncpa %s17, 0
    loop: start=0, step=1, limit=4
    $region2: #{tpu_custom_call.1} parent=1 // loop_pre_header
      _
    $region3: #{tpu_custom_call.1} parent=1 // loop_header
      %s20 = sphi 0, %s24
      %p21 = scmp.ge.s32.totalorder %s20, 4
      %s28 = sphi 0, %s28
      %s30 = sphi 0, %s28
      %s31 = sphi 0, %s30
      %s45 = sphi 0, %s31
      %s51 = sphi 0, %s53
      %s54 = sphi 0, %s51
      %s55 = sphi 0, %s54
      %s71 = sphi 0, %s55
      %s77 = sphi 0, %s79
      %s80 = sphi 0, %s77
      %s81 = sphi 0, %s80
      %s97 = sphi 0, %s81
      %s103 = sphi 0, %s105
      %s106 = sphi 0, %s103
      %s107 = sphi 0, %s106
      %s123 = sphi 0, %s107
      %s129 = sphi 0, %s131
      %s132 = sphi 0, %s129
      %s133 = sphi 0, %s132
      %s149 = sphi 0, %s133
    $region4: #{tpu_custom_call.1} parent=1 // loop_header_branch
      %23 = sbr.rel (%p21) target = $region8
    $region5: #{tpu_custom_call.1} parent=1 // loop_body
      %s25 = ssub.s32 %s20, 1
      %s26 = ssub.s32 %s20, 2
      %s27 = sadd.s32 %s20, 1
      %s29 = sadd.s32 %s28, 1
      %p32 = scmp.eq.s32.totalorder %s20, 1
      %p33 = scmp.ne.s32.totalorder %s28, %s30
      %p34 = scmp.eq.s32.totalorder %s20, 0
      %p35 = por %p33, %p34
      %p36 = scmp.ne.s32.totalorder %s28, %s30
      %p37 = scmp.eq.s32.totalorder %s25, 1
      %p38 = por %p36, %p37
      %p39 = scmp.ne.s32.totalorder %s30, %s31
      %p40 = scmp.eq.s32.totalorder %s25, 0
      %p41 = por %p39, %p40
      %p42 = scmp.ne.s32.totalorder %s30, %s31
      %p43 = scmp.eq.s32.totalorder %s26, 1
      %p44 = por %p42, %p43
      %p46 = scmp.ne.s32.totalorder %s31, %s45
      %p47 = scmp.eq.s32.totalorder %s26, 0
      %p48 = por %p46, %p47
      %s49 = ssub.s32 %s20, %s27
      %p50 = scmp.eq.s32.totalorder %s49, 0
      %s52 = sadd.s32 %s51, 1
      %s53 = scalar_select %p50, %s51, %s52
      %p56 = pneg %p50
      %p57 = scmp.eq.s32.totalorder %s20, 1
      %p58 = por %p56, %p57
      %p59 = scmp.ne.s32.totalorder %s51, %s54
      %p60 = scmp.eq.s32.totalorder %s20, 0
      %p61 = por %p59, %p60
      %p62 = scmp.ne.s32.totalorder %s51, %s54
      %p63 = scmp.eq.s32.totalorder %s25, 1
      %p64 = por %p62, %p63
      %p65 = scmp.ne.s32.totalorder %s54, %s55
      %p66 = scmp.eq.s32.totalorder %s25, 0
      %p67 = por %p65, %p66
      %p68 = scmp.ne.s32.totalorder %s54, %s55
      %p69 = scmp.eq.s32.totalorder %s26, 1
      %p70 = por %p68, %p69
      %p72 = scmp.ne.s32.totalorder %s55, %s71
      %p73 = scmp.eq.s32.totalorder %s26, 0
      %p74 = por %p72, %p73
      %s75 = ssub.s32 %s20, %s27
      %p76 = scmp.eq.s32.totalorder %s75, 0
      %s78 = sadd.s32 %s77, 1
      %s79 = scalar_select %p76, %s77, %s78
      %p82 = pneg %p76
      %p83 = scmp.eq.s32.totalorder %s20, 1
      %p84 = por %p82, %p83
      %p85 = scmp.ne.s32.totalorder %s77, %s80
      %p86 = scmp.eq.s32.totalorder %s20, 0
      %p87 = por %p85, %p86
      %p88 = scmp.ne.s32.totalorder %s77, %s80
      %p89 = scmp.eq.s32.totalorder %s25, 1
      %p90 = por %p88, %p89
      %p91 = scmp.ne.s32.totalorder %s80, %s81
      %p92 = scmp.eq.s32.totalorder %s25, 0
      %p93 = por %p91, %p92
      %p94 = scmp.ne.s32.totalorder %s80, %s81
      %p95 = scmp.eq.s32.totalorder %s26, 1
      %p96 = por %p94, %p95
      %p98 = scmp.ne.s32.totalorder %s81, %s97
      %p99 = scmp.eq.s32.totalorder %s26, 0
      %p100 = por %p98, %p99
      %s101 = ssub.s32 %s20, %s27
      %p102 = scmp.eq.s32.totalorder %s101, 0
      %s104 = sadd.s32 %s103, 1
      %s105 = scalar_select %p102, %s103, %s104
      %p108 = pneg %p102
      %p109 = scmp.eq.s32.totalorder %s20, 1
      %p110 = por %p108, %p109
      %p111 = scmp.ne.s32.totalorder %s103, %s106
      %p112 = scmp.eq.s32.totalorder %s20, 0
      %p113 = por %p111, %p112
      %p114 = scmp.ne.s32.totalorder %s103, %s106
      %p115 = scmp.eq.s32.totalorder %s25, 1
      %p116 = por %p114, %p115
      %p117 = scmp.ne.s32.totalorder %s106, %s107
      %p118 = scmp.eq.s32.totalorder %s25, 0
      %p119 = por %p117, %p118
      %p120 = scmp.ne.s32.totalorder %s106, %s107
      %p121 = scmp.eq.s32.totalorder %s26, 1
      %p122 = por %p120, %p121
      %p124 = scmp.ne.s32.totalorder %s107, %s123
      %p125 = scmp.eq.s32.totalorder %s26, 0
      %p126 = por %p124, %p125
      %s127 = ssub.s32 %s20, %s27
      %p128 = scmp.eq.s32.totalorder %s127, 0
      %s130 = sadd.s32 %s129, 1
      %s131 = scalar_select %p128, %s129, %s130
      %p134 = pneg %p128
      %p135 = scmp.eq.s32.totalorder %s20, 1
      %p136 = por %p134, %p135
      %p137 = scmp.ne.s32.totalorder %s129, %s132
      %p138 = scmp.eq.s32.totalorder %s20, 0
      %p139 = por %p137, %p138
      %p140 = scmp.ne.s32.totalorder %s129, %s132
      %p141 = scmp.eq.s32.totalorder %s25, 1
      %p142 = por %p140, %p141
      %p143 = scmp.ne.s32.totalorder %s132, %s133
      %p144 = scmp.eq.s32.totalorder %s25, 0
      %p145 = por %p143, %p144
      %p146 = scmp.ne.s32.totalorder %s132, %s133
      %p147 = scmp.eq.s32.totalorder %s26, 1
      %p148 = por %p146, %p147
      %p150 = scmp.ne.s32.totalorder %s133, %s149
      %p151 = scmp.eq.s32.totalorder %s26, 0
      %p152 = por %p150, %p151
      %p153 = scmp.le.s32.totalorder 1, %s20
      %p154 = scmp.lt.s32.totalorder %s20, 3
      %p155 = pnand %p153, %p154
      %p156 = pneg %p155
      // Predicated region
      $region9: #{tpu_custom_call.1} parent=5 // pred_check
        _
      $region10: #{tpu_custom_call.1} parent=5 // pred_check_branch
        %158 = sbr.rel (%p155) target = $region12
      $region11: #{tpu_custom_call.1} parent=5 // pred_region
        %s159 = ssub.s32 %s20, 1
        // Predicated region
        $region13: #{tpu_custom_call.1} parent=11 // pred_check
          %p160 = pneg %p41
        $region14: #{tpu_custom_call.1} parent=11 // pred_check_branch
          %162 = sbr.rel (%p160) target = $region16
        $region15: #{tpu_custom_call.1} parent=11 // pred_region
          %164 = vsyncadd [#allocation5], 0
          %s166 = sshll.u32 %s0, 4
          %s167 = int_to_ptr.hbm [resolvable:$true] %s166
          %169 = dma.hbm_to_smem %s167, 16, [#allocation2], [#allocation5]
        $region16: #{tpu_custom_call.1} parent=11 // pred_fallthru
          _
      $region12: #{tpu_custom_call.1} parent=5 // pred_fallthru
        _
      %p170 = scmp.lt.s32.totalorder %s20, 2
      // Predicated region
      $region17: #{tpu_custom_call.1} parent=5 // pred_check
        %p171 = pneg %p170
      $region18: #{tpu_custom_call.1} parent=5 // pred_check_branch
        %173 = sbr.rel (%p171) target = $region20
      $region19: #{tpu_custom_call.1} parent=5 // pred_region
        // Predicated region
        $region21: #{tpu_custom_call.1} parent=19 // pred_check
          %p174 = pneg %p61
        $region22: #{tpu_custom_call.1} parent=19 // pred_check_branch
          %176 = sbr.rel (%p174) target = $region24
        $region23: #{tpu_custom_call.1} parent=19 // pred_region
          %s177 = sand.u32 %s51, 1
          %s178 = scalar_lea.sflag [#allocation3], %s177
          %s179 = sand.u32 %s51, 1
          %s180 = smul.addr %s179, 8
          %s181 = scalar_lea.vmem [#allocation6], %s180
          %183 = vsyncadd %s178, 0
          %s184 = smul.addr %s20, 8
          %s185 = scalar_lea.hbm %s1, %s184
          %s187 = sshll.u32 %s185, 4
          %s188 = int_to_ptr.hbm [resolvable:$true] %s187
          %s189 = sshll.u32 %s181, 4
          %s190 = int_to_ptr.vmem [resolvable:$true] %s189
          %192 = dma.hbm_to_vmem [thread:$0]  %s188, 128, %s190, %s178
        $region24: #{tpu_custom_call.1} parent=19 // pred_fallthru
          _
        // Predicated region
        $region25: #{tpu_custom_call.1} parent=19 // pred_check
          %p193 = pneg %p87
        $region26: #{tpu_custom_call.1} parent=19 // pred_check_branch
          %195 = sbr.rel (%p193) target = $region28
        $region27: #{tpu_custom_call.1} parent=19 // pred_region
          %s196 = sand.u32 %s20, 1
          %s197 = scalar_lea.sflag [#allocation8], %s196
          %s198 = sand.u32 %s77, 1
          %s199 = smul.addr %s198, 8
          %s200 = scalar_lea.vmem [#allocation7], %s199
          %202 = vsyncadd %s197, 0
          %s203 = smul.addr %s20, 8
          %s204 = scalar_lea.hbm %s2, %s203
          %s206 = sshll.u32 %s204, 4
          %s207 = int_to_ptr.hbm [resolvable:$true] %s206
          %s208 = sshll.u32 %s200, 4
          %s209 = int_to_ptr.vmem [resolvable:$true] %s208
          %211 = dma.hbm_to_vmem [thread:$0]  %s207, 128, %s209, %s197
        $region28: #{tpu_custom_call.1} parent=19 // pred_fallthru
          _
        // Predicated region
        $region29: #{tpu_custom_call.1} parent=19 // pred_check
          %p212 = pneg %p113
        $region30: #{tpu_custom_call.1} parent=19 // pred_check_branch
          %214 = sbr.rel (%p212) target = $region32
        $region31: #{tpu_custom_call.1} parent=19 // pred_region
          %s215 = sand.u32 %s20, 1
          %s216 = scalar_lea.sflag [#allocation8], %s215
          %s217 = sand.u32 %s103, 1
          %s218 = smul.addr %s217, 8
          %s219 = scalar_lea.vmem [#allocation9], %s218
          %221 = vsyncadd %s216, 0
          %s222 = smul.addr %s20, 8
          %s223 = scalar_lea.hbm %s3, %s222
          %s225 = sshll.u32 %s223, 4
          %s226 = int_to_ptr.hbm [resolvable:$true] %s225
          %s227 = sshll.u32 %s219, 4
          %s228 = int_to_ptr.vmem [resolvable:$true] %s227
          %230 = dma.hbm_to_vmem [thread:$0]  %s226, 128, %s228, %s216
        $region32: #{tpu_custom_call.1} parent=19 // pred_fallthru
          _
      $region20: #{tpu_custom_call.1} parent=5 // pred_fallthru
        _
      %p231 = scmp.le.s32.totalorder 1, %s20
      %p232 = scmp.lt.s32.totalorder %s20, 3
      %p233 = pnand %p231, %p232
      %p234 = pneg %p233
      // Predicated region
      $region33: #{tpu_custom_call.1} parent=5 // pred_check
        _
      $region34: #{tpu_custom_call.1} parent=5 // pred_check_branch
        %236 = sbr.rel (%p233) target = $region36
      $region35: #{tpu_custom_call.1} parent=5 // pred_region
        %s237 = ssub.s32 %s20, 1
        // Predicated region
        $region37: #{tpu_custom_call.1} parent=35 // pred_check
          %p238 = pneg %p41
        $region38: #{tpu_custom_call.1} parent=35 // pred_check_branch
          %240 = sbr.rel (%p238) target = $region40
        $region39: #{tpu_custom_call.1} parent=35 // pred_region
          %242 = dma.done [#allocation5], 16
        $region40: #{tpu_custom_call.1} parent=35 // pred_fallthru
          _
        %s243 = sand.u32 %s54, 1
        %s244 = scalar_lea.sflag [#allocation3], %s243
        %s245 = sand.u32 %s54, 1
        %s246 = smul.addr %s245, 8
        %s247 = scalar_lea.vmem [#allocation6], %s246
        // Predicated region
        $region41: #{tpu_custom_call.1} parent=35 // pred_check
          %p248 = pneg %p67
        $region42: #{tpu_custom_call.1} parent=35 // pred_check_branch
          %250 = sbr.rel (%p248) target = $region44
        $region43: #{tpu_custom_call.1} parent=35 // pred_region
          %252 = dma.done %s244, 128
        $region44: #{tpu_custom_call.1} parent=35 // pred_fallthru
          _
        %s253 = sand.u32 %s25, 1
        %s254 = scalar_lea.sflag [#allocation8], %s253
        %s255 = sand.u32 %s80, 1
        %s256 = smul.addr %s255, 8
        %s257 = scalar_lea.vmem [#allocation7], %s256
        // Predicated region
        $region45: #{tpu_custom_call.1} parent=35 // pred_check
          %p258 = pneg %p93
        $region46: #{tpu_custom_call.1} parent=35 // pred_check_branch
          %260 = sbr.rel (%p258) target = $region48
        $region47: #{tpu_custom_call.1} parent=35 // pred_region
          %262 = dma.done %s254, 128
        $region48: #{tpu_custom_call.1} parent=35 // pred_fallthru
          _
        %s263 = sand.u32 %s25, 1
        %s264 = scalar_lea.sflag [#allocation8], %s263
        %s265 = sand.u32 %s106, 1
        %s266 = smul.addr %s265, 8
        %s267 = scalar_lea.vmem [#allocation9], %s266
        // Predicated region
        $region49: #{tpu_custom_call.1} parent=35 // pred_check
          %p268 = pneg %p119
        $region50: #{tpu_custom_call.1} parent=35 // pred_check_branch
          %270 = sbr.rel (%p268) target = $region52
        $region51: #{tpu_custom_call.1} parent=35 // pred_region
          %272 = dma.done %s264, 128
        $region52: #{tpu_custom_call.1} parent=35 // pred_fallthru
          _
        %273 = sfence
        %p274 = pneg %p41
        %p275 = pneg %p38
        %s276 = sand.u32 %s54, 1
        %s277 = scalar_lea.sflag [#allocation3], %s276
        %s278 = sand.u32 %s54, 1
        %s279 = smul.addr %s278, 8
        %s280 = scalar_lea.vmem [#allocation6], %s279
        %p281 = pneg %p67
        %p282 = pneg %p64
        %s283 = sand.u32 %s25, 1
        %s284 = scalar_lea.sflag [#allocation8], %s283
        %s285 = sand.u32 %s80, 1
        %s286 = smul.addr %s285, 8
        %s287 = scalar_lea.vmem [#allocation7], %s286
        %p288 = pneg %p93
        %p289 = pneg %p90
        %s290 = sand.u32 %s25, 1
        %s291 = scalar_lea.sflag [#allocation8], %s290
        %s292 = sand.u32 %s106, 1
        %s293 = smul.addr %s292, 8
        %s294 = scalar_lea.vmem [#allocation9], %s293
        %p295 = pneg %p119
        %p296 = pneg %p116
        %p297 = pneg %p145
        %p298 = pneg %p142
        %s299 = sand.u32 %s132, 1
        %s300 = scalar_lea.sflag [#allocation4], %s299
        %s301 = sand.u32 %s132, 1
        %s302 = smul.addr %s301, 8
        %s303 = scalar_lea.vmem [#allocation10], %s302
        %v304 = vld [vmem:[%s247] sm:$0xff]
        %v305 = vld [vmem:[%s257] sm:$0xff]
        %s306 = sld [smem:[#allocation2]]
        %v307 = vstv %s306
        %v308 = vmul.f32 %v305, %v307
        %v309 = vadd.f32 %v304, %v308
        %v310 = vld [vmem:[%s267] sm:$0xff]
        %s311 = sld [smem:[#allocation2 + $0x1]]
        %v312 = vstv %s311
        %v313 = vmul.f32 %v310, %v312
        %v314 = vadd.f32 %v309, %v313
        %315 = vst [vmem:[%s303] sm:$0xff] %v314
        %s316 = sand.u32 %s132, 1
        %s317 = scalar_lea.sflag [#allocation4], %s316
        %s318 = sand.u32 %s132, 1
        %s319 = smul.addr %s318, 8
        %s320 = scalar_lea.vmem [#allocation10], %s319
        // Predicated region
        $region53: #{tpu_custom_call.1} parent=35 // pred_check
          %p321 = pneg %p142
        $region54: #{tpu_custom_call.1} parent=35 // pred_check_branch
          %323 = sbr.rel (%p321) target = $region56
        $region55: #{tpu_custom_call.1} parent=35 // pred_region
          %325 = vsyncadd %s317, 0
          %s326 = smul.addr %s25, 8
          %s327 = scalar_lea.hbm %s4, %s326
          %s329 = sshll.u32 %s320, 4
          %s330 = int_to_ptr.vmem [resolvable:$true] %s329
          %s331 = sshll.u32 %s327, 4
          %s332 = int_to_ptr.hbm [resolvable:$true] %s331
          %334 = dma.vmem_to_hbm [thread:$0]  %s330, 128, %s332, %s317
        $region56: #{tpu_custom_call.1} parent=35 // pred_fallthru
          _
      $region36: #{tpu_custom_call.1} parent=5 // pred_fallthru
        _
      %p335 = scmp.le.s32.totalorder 2, %s20
      // Predicated region
      $region57: #{tpu_custom_call.1} parent=5 // pred_check
        %p336 = pneg %p335
      $region58: #{tpu_custom_call.1} parent=5 // pred_check_branch
        %338 = sbr.rel (%p336) target = $region60
      $region59: #{tpu_custom_call.1} parent=5 // pred_region
        %s339 = ssub.s32 %s20, 2
        // Predicated region
        $region61: #{tpu_custom_call.1} parent=59 // pred_check
          %p340 = pneg %p148
        $region62: #{tpu_custom_call.1} parent=59 // pred_check_branch
          %342 = sbr.rel (%p340) target = $region64
        $region63: #{tpu_custom_call.1} parent=59 // pred_region
          %s343 = sand.u32 %s133, 1
          %s344 = scalar_lea.sflag [#allocation4], %s343
          %s345 = sand.u32 %s133, 1
          %s346 = smul.addr %s345, 8
          %s347 = scalar_lea.vmem [#allocation10], %s346
          %349 = dma.done %s344, 128
        $region64: #{tpu_custom_call.1} parent=59 // pred_fallthru
          _
      $region60: #{tpu_custom_call.1} parent=5 // pred_fallthru
        _
    $region6: #{tpu_custom_call.1} parent=1 // loop_footer
      %s24 = sadd.s32 1, %s20
    $region7: #{tpu_custom_call.1} parent=1 // loop_footer_branch
      %19 = sbr.rel target = $region3
    $region8: #{tpu_custom_call.1} parent=1 // loop_exit
      _
    %350 = vsyncpa [#allocation3], 1
    %s351 = scalar_lea.sflag [#allocation3], 1
    %352 = vsyncpa %s351, 1
    %353 = vsyncpa [#allocation8], 1
    %s354 = scalar_lea.sflag [#allocation8], 1
    %355 = vsyncpa %s354, 1
    %356 = vsyncpa [#allocation4], 1
    %s357 = scalar_lea.sflag [#allocation4], 1
    %358 = vsyncpa %s357, 1
    %359 = vsyncpa [#allocation5], 1
    %s360 = scalar_lea.sflag [#allocation5], 1
    %361 = vsyncpa %s360, 1

</llo_original>
